<compile_context>
chip_gen: v7x
topology: tpu7x:2x2x1
jax: 0.10.0
libtpu: 0.0.40
codegen_flags: <defaults>
</compile_context>

<pallas_src>
import jax
import jax.numpy as jnp
from jax import lax
from jax.experimental import pallas as pl
from jax.experimental.pallas import tpu as pltpu


# Compile-time constant Sobel-x filter (same for every channel, as in the
# PyTorch module's __init__).
_SOBEL_X = ((1.0, 0.0, -1.0),
            (2.0, 0.0, -2.0),
            (1.0, 0.0, -1.0))


def _make_kernel(H: int, W: int):
    def kernel(x_ref, o_ref):
        # x_ref : VMEM (Bb, H, W)  block of input planes (fused N*C axis)
        # o_ref : VMEM (Bb, H, W)  |sobel_x(x)|
        x = x_ref[...].astype(jnp.float32)
        shape = x.shape
        row = lax.broadcasted_iota(jnp.int32, shape, 1)
        col = lax.broadcasted_iota(jnp.int32, shape, 2)

        # Separable Sobel-x, cross-correlation orientation (== PyTorch Conv2d).
        # Vertical [1, 2, 1] pass with zero boundary rows:
        #   v[i, j] = x[i-1, j] + 2*x[i, j] + x[i+1, j]
        x_m1 = jnp.where(row > 0, pltpu.roll(x, 1, axis=1), 0.0)           # x[i-1]
        x_p1 = jnp.where(row < H - 1, pltpu.roll(x, H - 1, axis=1), 0.0)   # x[i+1]
        v = x_m1 + 2.0 * x + x_p1

        # Horizontal [1, 0, -1] pass with zero boundary columns:
        #   out[i, j] = v[i, j-1] - v[i, j+1]
        v_m1 = jnp.where(col > 0, pltpu.roll(v, 1, axis=2), 0.0)           # v[:, j-1]
        v_p1 = jnp.where(col < W - 1, pltpu.roll(v, W - 1, axis=2), 0.0)   # v[:, j+1]

        o_ref[...] = jnp.abs(v_m1 - v_p1).astype(o_ref.dtype)

    return kernel


def _round_up(x: int, m: int) -> int:
    return -(-x // m) * m


def _hw_params():
    """Returns (block_budget_bytes, vmem_limit_bytes, min_grid_steps)."""
    vmem_bytes = 64 << 20            # conservative default (v7x per-core VMEM)
    try:
        vmem_bytes = int(pltpu.get_tpu_info().vmem_capacity_bytes)
    except Exception:
        pass
    kind = ""
    try:
        kind = jax.devices()[0].device_kind.lower()
    except Exception:
        pass
    if any(g in kind for g in ("v2", "v3", "v4", "v5", "v6")):
        min_steps = 1                # single TensorCore: no reason to split blocks
    else:
        min_steps = 2                # v7x / unknown: keep both TCs busy
    budget = int(vmem_bytes * 0.6)
    limit = min(int(vmem_bytes * 0.85), 120 << 20)
    return budget, limit, min_steps


def _pick_block_planes(NC: int, H: int, W: int, itemsize: int,
                       vmem_budget_bytes: int, min_steps: int) -> int:
    """Largest number of (H, W) planes per grid step that fits the VMEM budget."""
    sublane = {4: 8, 2: 16, 1: 32}.get(itemsize, 8)
    Hs = _round_up(H, sublane)       # physical sublane extent
    Wl = _round_up(W, 128)           # physical lane extent
    io_bytes = 4 * itemsize * Hs * Wl   # input + output blocks, double-buffered
    tmp_bytes = 8 * 4 * Hs * Wl         # generous: live f32/i32 temporaries in kernel
    per_plane = io_bytes + tmp_bytes
    cap = max(1, vmem_budget_bytes // per_plane)
    if min_steps > 1 and NC >= min_steps:
        cap = min(cap, max(1, NC // min_steps))
    return int(max(1, min(NC, cap)))


def sobelxy(x: jnp.ndarray) -> jnp.ndarray:
    """x: (N, C, H, W). Returns |depthwise Sobel-x conv(x)| with padding=1."""
    N, C, H, W = x.shape
    NC = N * C
    xr = x.reshape(NC, H, W)         # free reshape (contiguous), no HBM copy

    budget, vmem_limit, min_steps = _hw_params()
    Bb = _pick_block_planes(NC, H, W, jnp.dtype(x.dtype).itemsize, budget, min_steps)
    grid = (pl.cdiv(NC, Bb),)

    out = pl.pallas_call(
        _make_kernel(H, W),
        out_shape=jax.ShapeDtypeStruct((NC, H, W), x.dtype),
        grid_spec=pltpu.PrefetchScalarGridSpec(
            num_scalar_prefetch=0,
            grid=grid,
            in_specs=[pl.BlockSpec((Bb, H, W), lambda i: (i, 0, 0))],
            out_specs=pl.BlockSpec((Bb, H, W), lambda i: (i, 0, 0)),
        ),
        compiler_params=pltpu.CompilerParams(
            dimension_semantics=("parallel",),
            vmem_limit_bytes=vmem_limit,
        ),
    )(xr)
    return out.reshape(N, C, H, W)


def _make_sobel_weight(channels: int) -> jnp.ndarray:
    """Per-channel (C, 3, 3) depthwise filter, identical to the PyTorch module."""
    sobel = jnp.array(_SOBEL_X, dtype=jnp.float32)
    return jnp.broadcast_to(sobel[None, :, :], (channels, 3, 3))


def _reference(x: jnp.ndarray, weight: jnp.ndarray) -> jnp.ndarray:
    """Pure-JAX reference (depthwise conv + abs) for validation."""
    C = x.shape[1]
    w = weight[:, None, :, :]  # (C, 1, 3, 3)
    out = lax.conv_general_dilated(
        x, w,
        window_strides=(1, 1),
        padding=((1, 1), (1, 1)),
        dimension_numbers=("NCHW", "OIHW", "NCHW"),
        feature_group_count=C,
    )
    return jnp.abs(out)


if __name__ == "__main__":
    N, C, H, W = 2, 4, 16, 16
    key = jax.random.PRNGKey(0)
    x = jax.random.normal(key, (N, C, H, W), dtype=jnp.float32)

    out = jax.block_until_ready(sobelxy(x))

    ref = jax.block_until_ready(_reference(x, _make_sobel_weight(C)))
    assert out.shape == (N, C, H, W)
    assert jnp.allclose(out, ref, atol=1e-5, rtol=1e-5)

    print("KERNEL_OK")
</pallas_src>

<mosaic_0001>
module attributes {stable_mosaic.version = 11 : i64} {
  func.func @kernel(%arg0: i32, %arg1: memref<4x16x16xf32, #tpu.memory_space<vmem>>, %arg2: memref<4x16x16xf32, #tpu.memory_space<vmem>>) attributes {dimension_semantics = [#tpu.dimension_semantics<parallel>], iteration_bounds = array<i64: 2>, scalar_prefetch = 0 : i64, scratch_operands = 0 : i64, tpu.core_type = #tpu.core_type<tc>, window_params = [{transform_indices = @transform_0, window_bounds = array<i64: 4, 16, 16>}, {transform_indices = @transform_1, window_bounds = array<i64: 4, 16, 16>}]} {
    %c0 = arith.constant 0 : index
    %c0_0 = arith.constant 0 : index
    %c0_1 = arith.constant 0 : index
    %0 = vector.load %arg1[%c0, %c0_0, %c0_1] : memref<4x16x16xf32, #tpu.memory_space<vmem>>, vector<4x16x16xf32>
    %1 = tpu.iota {dimensions = array<i32: 1>} : vector<4x16x16xi32>
    %2 = tpu.iota {dimensions = array<i32: 2>} : vector<4x16x16xi32>
    %c0_i32 = arith.constant 0 : i32
    %3 = vector.broadcast %c0_i32 : i32 to vector<4x16x16xi32>
    %4 = arith.cmpi sgt, %1, %3 : vector<4x16x16xi32>
    %c1_i32 = arith.constant 1 : i32
    %5 = tpu.dynamic_rotate %0 by %c1_i32 dim 1 : vector<4x16x16xf32>, i32 -> vector<4x16x16xf32>
    %cst = arith.constant 0.000000e+00 : f32
    %6 = vector.broadcast %cst : f32 to vector<4x16x16xf32>
    %7 = arith.select %4, %5, %6 : vector<4x16x16xi1>, vector<4x16x16xf32>
    %c15_i32 = arith.constant 15 : i32
    %8 = vector.broadcast %c15_i32 : i32 to vector<4x16x16xi32>
    %9 = arith.cmpi slt, %1, %8 : vector<4x16x16xi32>
    %c15_i32_2 = arith.constant 15 : i32
    %10 = tpu.dynamic_rotate %0 by %c15_i32_2 dim 1 : vector<4x16x16xf32>, i32 -> vector<4x16x16xf32>
    %cst_3 = arith.constant 0.000000e+00 : f32
    %11 = vector.broadcast %cst_3 : f32 to vector<4x16x16xf32>
    %12 = arith.select %9, %10, %11 : vector<4x16x16xi1>, vector<4x16x16xf32>
    %cst_4 = arith.constant 2.000000e+00 : f32
    %13 = vector.broadcast %cst_4 : f32 to vector<4x16x16xf32>
    %14 = arith.mulf %13, %0 : vector<4x16x16xf32>
    %15 = arith.addf %7, %14 : vector<4x16x16xf32>
    %16 = arith.addf %15, %12 : vector<4x16x16xf32>
    %c0_i32_5 = arith.constant 0 : i32
    %17 = vector.broadcast %c0_i32_5 : i32 to vector<4x16x16xi32>
    %18 = arith.cmpi sgt, %2, %17 : vector<4x16x16xi32>
    %c1_i32_6 = arith.constant 1 : i32
    %19 = tpu.dynamic_rotate %16 by %c1_i32_6 dim 2 : vector<4x16x16xf32>, i32 -> vector<4x16x16xf32>
    %cst_7 = arith.constant 0.000000e+00 : f32
    %20 = vector.broadcast %cst_7 : f32 to vector<4x16x16xf32>
    %21 = arith.select %18, %19, %20 : vector<4x16x16xi1>, vector<4x16x16xf32>
    %c15_i32_8 = arith.constant 15 : i32
    %22 = vector.broadcast %c15_i32_8 : i32 to vector<4x16x16xi32>
    %23 = arith.cmpi slt, %2, %22 : vector<4x16x16xi32>
    %c15_i32_9 = arith.constant 15 : i32
    %24 = tpu.dynamic_rotate %16 by %c15_i32_9 dim 2 : vector<4x16x16xf32>, i32 -> vector<4x16x16xf32>
    %cst_10 = arith.constant 0.000000e+00 : f32
    %25 = vector.broadcast %cst_10 : f32 to vector<4x16x16xf32>
    %26 = arith.select %23, %24, %25 : vector<4x16x16xi1>, vector<4x16x16xf32>
    %27 = arith.subf %21, %26 : vector<4x16x16xf32>
    %28 = math.absf %27 : vector<4x16x16xf32>
    %c0_11 = arith.constant 0 : index
    %c0_12 = arith.constant 0 : index
    %c0_13 = arith.constant 0 : index
    %29 = vector.load %arg2[%c0_11, %c0_12, %c0_13] : memref<4x16x16xf32, #tpu.memory_space<vmem>>, vector<4x16x16xf32>
    tpu.vector_store %arg2[%c0_11, %c0_12, %c0_13], %28 {strides = array<i32>} : memref<4x16x16xf32, #tpu.memory_space<vmem>>, vector<4x16x16xf32>,
    return
  }
  func.func @transform_0(%arg0: i32) -> (i32, i32, i32) {
    %c0_i32 = arith.constant 0 : i32
    %c0_i32_0 = arith.constant 0 : i32
    %c0_i32_1 = arith.constant 0 : i32
    return %arg0, %c0_i32, %c0_i32_0 : i32, i32, i32
  }
  func.func @transform_1(%arg0: i32) -> (i32, i32, i32) {
    %c0_i32 = arith.constant 0 : i32
    %c0_i32_0 = arith.constant 0 : i32
    %c0_i32_1 = arith.constant 0 : i32
    return %arg0, %c0_i32, %c0_i32_0 : i32, i32, i32
  }
}

</mosaic_0001>

<llo_original>
// kernel: tpu_custom_call.1
$region0: #{tpu_custom_call.1}
  #allocation0 [shape = 'u32[]', space=smem, size = 0x4, offset = 0x4, fixed_abs, tag = 'smem constant byte address 0x4 - core index']
  #allocation1 [shape = 'u32[144,128]{1,0:T(1,128)}', space=vmem, size = 0x12000, scoped, tag = 'internal scratch']
  %s0 = inlined_call_operand.hbm [shape: f32[8,16,16], index: 0, kind: input, shape index: {}]
  %s1 = inlined_call_operand.hbm [shape: f32[8,16,16], index: 1, kind: output, shape index: {}]
  %s2 = sld [smem:[#allocation0]]
  $region41: #{tpu_custom_call.1} parent=0
    _
  %s4 = ssub.s32 1, %s2
  %s5 = scalar_select 0, %s4, %s2
  $region1: #{tpu_custom_call.1} parent=0
    #allocation2 [shape = 'u8[65536]{0}', space=vmem, size = 0x10000, scoped, tag = 'input window, operand 0']
    #allocation3 [shape = 's32[2]{0}', space=sflag, size = 0x8, scoped, tag = 'scoped memory for tpu_custom_call.1']
    #allocation4 [shape = 's32[2]{0}', space=sflag, size = 0x8, scoped, tag = 'scoped memory for tpu_custom_call.1']
    #allocation5 [shape = 'u8[65536]{0}', space=vmem, size = 0x10000, scoped, tag = 'output window, operand 0']
    %6 = vsyncpa [#allocation3], 0
    %s7 = scalar_lea.sflag [#allocation3], 1
    %8 = vsyncpa %s7, 0
    %9 = vsyncpa [#allocation4], 0
    %s10 = scalar_lea.sflag [#allocation4], 1
    %11 = vsyncpa %s10, 0
    loop: start=0, step=1, limit=4
    $region2: #{tpu_custom_call.1} parent=1 // loop_pre_header
      _
    $region3: #{tpu_custom_call.1} parent=1 // loop_header
      %s13 = sphi 0, %s17
      %p14 = scmp.ge.s32.totalorder %s13, 4
      %s23 = sphi 0, %s25
      %s26 = sphi 0, %s23
      %s27 = sphi 0, %s26
      %s43 = sphi 0, %s27
      %s49 = sphi 0, %s51
      %s52 = sphi 0, %s49
      %s53 = sphi 0, %s52
      %s69 = sphi 0, %s53
    $region4: #{tpu_custom_call.1} parent=1 // loop_header_branch
      %16 = sbr.rel (%p14) target = $region8
    $region5: #{tpu_custom_call.1} parent=1 // loop_body
      %s18 = ssub.s32 %s13, 1
      %s19 = ssub.s32 %s13, 2
      %s20 = sadd.s32 %s13, 1
      %s21 = ssub.s32 %s13, %s20
      %p22 = scmp.eq.s32.totalorder %s21, 0
      %s24 = sadd.s32 %s23, 1
      %s25 = scalar_select %p22, %s23, %s24
      %p28 = pneg %p22
      %p29 = scmp.eq.s32.totalorder %s13, 1
      %p30 = por %p28, %p29
      %p31 = scmp.ne.s32.totalorder %s23, %s26
      %p32 = scmp.eq.s32.totalorder %s13, 0
      %p33 = por %p31, %p32
      %p34 = scmp.ne.s32.totalorder %s23, %s26
      %p35 = scmp.eq.s32.totalorder %s18, 1
      %p36 = por %p34, %p35
      %p37 = scmp.ne.s32.totalorder %s26, %s27
      %p38 = scmp.eq.s32.totalorder %s18, 0
      %p39 = por %p37, %p38
      %p40 = scmp.ne.s32.totalorder %s26, %s27
      %p41 = scmp.eq.s32.totalorder %s19, 1
      %p42 = por %p40, %p41
      %p44 = scmp.ne.s32.totalorder %s27, %s43
      %p45 = scmp.eq.s32.totalorder %s19, 0
      %p46 = por %p44, %p45
      %s47 = ssub.s32 %s13, %s20
      %p48 = scmp.eq.s32.totalorder %s47, 0
      %s50 = sadd.s32 %s49, 1
      %s51 = scalar_select %p48, %s49, %s50
      %p54 = pneg %p48
      %p55 = scmp.eq.s32.totalorder %s13, 1
      %p56 = por %p54, %p55
      %p57 = scmp.ne.s32.totalorder %s49, %s52
      %p58 = scmp.eq.s32.totalorder %s13, 0
      %p59 = por %p57, %p58
      %p60 = scmp.ne.s32.totalorder %s49, %s52
      %p61 = scmp.eq.s32.totalorder %s18, 1
      %p62 = por %p60, %p61
      %p63 = scmp.ne.s32.totalorder %s52, %s53
      %p64 = scmp.eq.s32.totalorder %s18, 0
      %p65 = por %p63, %p64
      %p66 = scmp.ne.s32.totalorder %s52, %s53
      %p67 = scmp.eq.s32.totalorder %s19, 1
      %p68 = por %p66, %p67
      %p70 = scmp.ne.s32.totalorder %s53, %s69
      %p71 = scmp.eq.s32.totalorder %s19, 0
      %p72 = por %p70, %p71
      %p73 = scmp.le.s32.totalorder 1, %s13
      %p74 = scmp.lt.s32.totalorder %s13, 3
      %p75 = pnand %p73, %p74
      %p76 = pneg %p75
      // Predicated region
      $region9: #{tpu_custom_call.1} parent=5 // pred_check
        _
      $region10: #{tpu_custom_call.1} parent=5 // pred_check_branch
        %78 = sbr.rel (%p75) target = $region12
      $region11: #{tpu_custom_call.1} parent=5 // pred_region
        %s79 = ssub.s32 %s13, 1
      $region12: #{tpu_custom_call.1} parent=5 // pred_fallthru
        _
      %p80 = scmp.lt.s32.totalorder %s13, 2
      // Predicated region
      $region13: #{tpu_custom_call.1} parent=5 // pred_check
        %p81 = pneg %p80
      $region14: #{tpu_custom_call.1} parent=5 // pred_check_branch
        %83 = sbr.rel (%p81) target = $region16
      $region15: #{tpu_custom_call.1} parent=5 // pred_region
        // Predicated region
        $region17: #{tpu_custom_call.1} parent=15 // pred_check
          %p84 = pneg %p33
        $region18: #{tpu_custom_call.1} parent=15 // pred_check_branch
          %86 = sbr.rel (%p84) target = $region20
        $region19: #{tpu_custom_call.1} parent=15 // pred_region
          %s87 = sand.u32 %s23, 1
          %s88 = scalar_lea.sflag [#allocation3], %s87
          %s89 = sand.u32 %s23, 1
          %s90 = smul.addr %s89, 64
          %s91 = scalar_lea.vmem [#allocation2], %s90
          %s92 = smul.u32 4, %s13
          %s94 = ssub.s32 1024, 1024
          %95 = vsyncadd %s88, %s94
          %s96 = smul.addr %s92, 2
          %s97 = smul.addr %s96, 128
          %s98 = scalar_lea.hbm %s0, %s97
          %s99 = sshll.u32 %s91, 4
          %s100 = int_to_ptr.vmem [resolvable:$true] %s99
          %105 = dma.hbm_to_vmem [thread:$0]  %s98, 1024, %s100, %s88, 128, 128, 8
        $region20: #{tpu_custom_call.1} parent=15 // pred_fallthru
          _
      $region16: #{tpu_custom_call.1} parent=5 // pred_fallthru
        _
      %p106 = scmp.le.s32.totalorder 1, %s13
      %p107 = scmp.lt.s32.totalorder %s13, 3
      %p108 = pnand %p106, %p107
      %p109 = pneg %p108
      // Predicated region
      $region21: #{tpu_custom_call.1} parent=5 // pred_check
        _
      $region22: #{tpu_custom_call.1} parent=5 // pred_check_branch
        %111 = sbr.rel (%p108) target = $region24
      $region23: #{tpu_custom_call.1} parent=5 // pred_region
        %s112 = ssub.s32 %s13, 1
        %s113 = sand.u32 %s26, 1
        %s114 = scalar_lea.sflag [#allocation3], %s113
        %s115 = sand.u32 %s26, 1
        %s116 = smul.addr %s115, 64
        %s117 = scalar_lea.vmem [#allocation2], %s116
        // Predicated region
        $region25: #{tpu_custom_call.1} parent=23 // pred_check
          %p118 = pneg %p39
        $region26: #{tpu_custom_call.1} parent=23 // pred_check_branch
          %120 = sbr.rel (%p118) target = $region28
        $region27: #{tpu_custom_call.1} parent=23 // pred_region
          %121 = dma.done %s114, 1024
        $region28: #{tpu_custom_call.1} parent=23 // pred_fallthru
          _
        %s122 = sand.u32 %s26, 1
        %s123 = scalar_lea.sflag [#allocation3], %s122
        %s124 = sand.u32 %s26, 1
        %s125 = smul.addr %s124, 64
        %s126 = scalar_lea.vmem [#allocation2], %s125
        %p127 = pneg %p39
        %p128 = pneg %p36
        %p129 = pneg %p65
        %p130 = pneg %p62
        %s131 = sand.u32 %s52, 1
        %s132 = scalar_lea.sflag [#allocation4], %s131
        %s133 = sand.u32 %s52, 1
        %s134 = smul.addr %s133, 64
        %s135 = scalar_lea.vmem [#allocation5], %s134
        %s136 = smul.u32 4, %s18
        %s137 = smul.u32 4, %s18
        %v138 = vld [vmem:[%s117] sm:$0xff]
        %v139 = vld [vmem:[%s117 + $0x8] sm:$0xff]
        %v140 = vld [vmem:[%s117 + $0x10] sm:$0xff]
        %v141 = vld [vmem:[%s117 + $0x18] sm:$0xff]
        %v142 = vld [vmem:[%s117 + $0x20] sm:$0xff]
        %v143 = vld [vmem:[%s117 + $0x28] sm:$0xff]
        %v144 = vld [vmem:[%s117 + $0x30] sm:$0xff]
        %v145 = vld [vmem:[%s117 + $0x38] sm:$0xff]
        %v146 = vlaneseq
        %v147 = vshrl.u32 %v146, 7
        %v148 = vadd.s32 %v147, 8
        %v149 = vlaneseq
        %v150 = vand.u32 %v149, 127
        %vm151 = vcmp.gt.s32.totalorder %v147, 0
        %vm152 = vcmp.gt.s32.totalorder %v148, 0
        %v153 = vrot.slane %v138, 7
        %v154 = vrot.slane %v140, 7
        %v155 = vrot.slane %v142, 7
        %v156 = vrot.slane %v144, 7
        %v157 = vrot.slane %v139, 7
        %v158 = vrot.slane %v141, 7
        %v159 = vrot.slane %v143, 7
        %v160 = vrot.slane %v145, 7
        %vm161 = vcmp.lt.s32.totalorder %v147, 1
        %v162 = vsel %vm161, %v153, %v157
        %v163 = vsel %vm161, %v154, %v158
        %v164 = vsel %vm161, %v155, %v159
        %v165 = vsel %vm161, %v156, %v160
        %v166 = vsel %vm161, %v157, %v153
        %v167 = vsel %vm161, %v158, %v154
        %v168 = vsel %vm161, %v159, %v155
        %v169 = vsel %vm161, %v160, %v156
        %v170 = vsel %vm151, %v166, 0.0
        %v171 = vsel %vm152, %v162, 0.0
        %v172 = vsel %vm151, %v167, 0.0
        %v173 = vsel %vm152, %v163, 0.0
        %v174 = vsel %vm151, %v168, 0.0
        %v175 = vsel %vm152, %v164, 0.0
        %v176 = vsel %vm151, %v169, 0.0
        %v177 = vsel %vm152, %v165, 0.0
        %vm178 = vcmp.lt.s32.totalorder %v147, 15
        %vm179 = vcmp.lt.s32.totalorder %v148, 15
        %v180 = vrot.slane %v138, 1
        %v181 = vrot.slane %v140, 1
        %v182 = vrot.slane %v142, 1
        %v183 = vrot.slane %v144, 1
        %v184 = vrot.slane %v139, 1
        %v185 = vrot.slane %v141, 1
        %v186 = vrot.slane %v143, 1
        %v187 = vrot.slane %v145, 1
        %vm188 = vcmp.lt.s32.totalorder %v147, 7
        %v189 = vsel %vm188, %v180, %v184
        %v190 = vsel %vm188, %v181, %v185
        %v191 = vsel %vm188, %v182, %v186
        %v192 = vsel %vm188, %v183, %v187
        %v193 = vsel %vm188, %v184, %v180
        %v194 = vsel %vm188, %v185, %v181
        %v195 = vsel %vm188, %v186, %v182
        %v196 = vsel %vm188, %v187, %v183
        %v197 = vsel %vm178, %v189, 0.0
        %v198 = vsel %vm179, %v193, 0.0
        %v199 = vsel %vm178, %v190, 0.0
        %v200 = vsel %vm179, %v194, 0.0
        %v201 = vsel %vm178, %v191, 0.0
        %v202 = vsel %vm179, %v195, 0.0
        %v203 = vsel %vm178, %v192, 0.0
        %v204 = vsel %vm179, %v196, 0.0
        %v205 = vmul.f32 %v138, 2.0
        %v206 = vmul.f32 %v139, 2.0
        %v207 = vmul.f32 %v140, 2.0
        %v208 = vmul.f32 %v141, 2.0
        %v209 = vmul.f32 %v142, 2.0
        %v210 = vmul.f32 %v143, 2.0
        %v211 = vmul.f32 %v144, 2.0
        %v212 = vmul.f32 %v145, 2.0
        %v213 = vadd.f32 %v170, %v205
        %v214 = vadd.f32 %v171, %v206
        %v215 = vadd.f32 %v172, %v207
        %v216 = vadd.f32 %v173, %v208
        %v217 = vadd.f32 %v174, %v209
        %v218 = vadd.f32 %v175, %v210
        %v219 = vadd.f32 %v176, %v211
        %v220 = vadd.f32 %v177, %v212
        %v221 = vadd.f32 %v213, %v197
        %v222 = vadd.f32 %v214, %v198
        %v223 = vadd.f32 %v215, %v199
        %v224 = vadd.f32 %v216, %v200
        %v225 = vadd.f32 %v217, %v201
        %v226 = vadd.f32 %v218, %v202
        %v227 = vadd.f32 %v219, %v203
        %v228 = vadd.f32 %v220, %v204
        %vm229 = vcmp.gt.s32.totalorder %v150, 0
        %vm230 = vcmask 1047680
        %231 = vrot.lane.b32.xlu0 %v221, 16
        %v232 = vpop.permute.xlu0 %231
        %v233 = vsel %vm230, %v232, %v221
        %234 = vrot.lane.b32.xlu0 %v222, 16
        %v235 = vpop.permute.xlu0 %234
        %v236 = vsel %vm230, %v235, %v222
        %237 = vrot.lane.b32.xlu0 %v223, 16
        %v238 = vpop.permute.xlu0 %237
        %v239 = vsel %vm230, %v238, %v223
        %240 = vrot.lane.b32.xlu0 %v224, 16
        %v241 = vpop.permute.xlu0 %240
        %v242 = vsel %vm230, %v241, %v224
        %243 = vrot.lane.b32.xlu0 %v225, 16
        %v244 = vpop.permute.xlu0 %243
        %v245 = vsel %vm230, %v244, %v225
        %246 = vrot.lane.b32.xlu0 %v226, 16
        %v247 = vpop.permute.xlu0 %246
        %v248 = vsel %vm230, %v247, %v226
        %249 = vrot.lane.b32.xlu0 %v227, 16
        %v250 = vpop.permute.xlu0 %249
        %v251 = vsel %vm230, %v250, %v227
        %252 = vrot.lane.b32.xlu0 %v228, 16
        %v253 = vpop.permute.xlu0 %252
        %v254 = vsel %vm230, %v253, %v228
        %255 = vrot.lane.b32.xlu0 %v233, 16
        %v256 = vpop.permute.xlu0 %255
        %257 = vrot.lane.b32.xlu0 %v236, 16
        %v258 = vpop.permute.xlu0 %257
        %259 = vrot.lane.b32.xlu0 %v239, 16
        %v260 = vpop.permute.xlu0 %259
        %261 = vrot.lane.b32.xlu0 %v242, 16
        %v262 = vpop.permute.xlu0 %261
        %263 = vrot.lane.b32.xlu0 %v245, 16
        %v264 = vpop.permute.xlu0 %263
        %265 = vrot.lane.b32.xlu0 %v248, 16
        %v266 = vpop.permute.xlu0 %265
        %267 = vrot.lane.b32.xlu0 %v251, 16
        %v268 = vpop.permute.xlu0 %267
        %269 = vrot.lane.b32.xlu0 %v254, 16
        %v270 = vpop.permute.xlu0 %269
        %v271 = vsel %vm230, %v256, %v221
        %v272 = vsel %vm230, %v258, %v222
        %v273 = vsel %vm230, %v260, %v223
        %v274 = vsel %vm230, %v262, %v224
        %v275 = vsel %vm230, %v264, %v225
        %v276 = vsel %vm230, %v266, %v226
        %v277 = vsel %vm230, %v268, %v227
        %v278 = vsel %vm230, %v270, %v228
        %287 = vrot.lane.b32.xlu0 %v271, 113
        %v288 = vpop.permute.xlu0 %287
        %289 = vrot.lane.b32.xlu0 %v272, 113
        %v290 = vpop.permute.xlu0 %289
        %291 = vrot.lane.b32.xlu0 %v273, 113
        %v292 = vpop.permute.xlu0 %291
        %293 = vrot.lane.b32.xlu0 %v274, 113
        %v294 = vpop.permute.xlu0 %293
        %295 = vrot.lane.b32.xlu0 %v275, 113
        %v296 = vpop.permute.xlu0 %295
        %297 = vrot.lane.b32.xlu0 %v276, 113
        %v298 = vpop.permute.xlu0 %297
        %299 = vrot.lane.b32.xlu0 %v277, 113
        %v300 = vpop.permute.xlu0 %299
        %301 = vrot.lane.b32.xlu0 %v278, 113
        %v302 = vpop.permute.xlu0 %301
        %v311 = vsel %vm229, %v288, 0.0
        %v312 = vsel %vm229, %v290, 0.0
        %v313 = vsel %vm229, %v292, 0.0
        %v314 = vsel %vm229, %v294, 0.0
        %v315 = vsel %vm229, %v296, 0.0
        %v316 = vsel %vm229, %v298, 0.0
        %v317 = vsel %vm229, %v300, 0.0
        %v318 = vsel %vm229, %v302, 0.0
        %vm319 = vcmp.lt.s32.totalorder %v150, 15
        %320 = vrot.lane.b32.xlu0 %v271, 127
        %v321 = vpop.permute.xlu0 %320
        %322 = vrot.lane.b32.xlu0 %v272, 127
        %v323 = vpop.permute.xlu0 %322
        %324 = vrot.lane.b32.xlu0 %v273, 127
        %v325 = vpop.permute.xlu0 %324
        %326 = vrot.lane.b32.xlu0 %v274, 127
        %v327 = vpop.permute.xlu0 %326
        %328 = vrot.lane.b32.xlu0 %v275, 127
        %v329 = vpop.permute.xlu0 %328
        %330 = vrot.lane.b32.xlu0 %v276, 127
        %v331 = vpop.permute.xlu0 %330
        %332 = vrot.lane.b32.xlu0 %v277, 127
        %v333 = vpop.permute.xlu0 %332
        %334 = vrot.lane.b32.xlu0 %v278, 127
        %v335 = vpop.permute.xlu0 %334
        %v344 = vsel %vm319, %v321, 0.0
        %v345 = vsel %vm319, %v323, 0.0
        %v346 = vsel %vm319, %v325, 0.0
        %v347 = vsel %vm319, %v327, 0.0
        %v348 = vsel %vm319, %v329, 0.0
        %v349 = vsel %vm319, %v331, 0.0
        %v350 = vsel %vm319, %v333, 0.0
        %v351 = vsel %vm319, %v335, 0.0
        %v352 = vsub.f32 %v311, %v344
        %v353 = vsub.f32 %v312, %v345
        %v354 = vsub.f32 %v313, %v346
        %v355 = vsub.f32 %v314, %v347
        %v356 = vsub.f32 %v315, %v348
        %v357 = vsub.f32 %v316, %v349
        %v358 = vsub.f32 %v317, %v350
        %v359 = vsub.f32 %v318, %v351
        %v360 = vand.u32 2147483647, %v352
        %v361 = vand.u32 2147483647, %v353
        %v362 = vand.u32 2147483647, %v354
        %v363 = vand.u32 2147483647, %v355
        %v364 = vand.u32 2147483647, %v356
        %v365 = vand.u32 2147483647, %v357
        %v366 = vand.u32 2147483647, %v358
        %v367 = vand.u32 2147483647, %v359
        %vm368 = vcmask 130048
        %369 = vst.msk [vmem:[%s135] sm:$0xff] %vm368, %v360
        %370 = vst.msk [vmem:[%s135 + $0x8] sm:$0xff] %vm368, %v361
        %371 = vst.msk [vmem:[%s135 + $0x10] sm:$0xff] %vm368, %v362
        %372 = vst.msk [vmem:[%s135 + $0x18] sm:$0xff] %vm368, %v363
        %373 = vst.msk [vmem:[%s135 + $0x20] sm:$0xff] %vm368, %v364
        %374 = vst.msk [vmem:[%s135 + $0x28] sm:$0xff] %vm368, %v365
        %375 = vst.msk [vmem:[%s135 + $0x30] sm:$0xff] %vm368, %v366
        %376 = vst.msk [vmem:[%s135 + $0x38] sm:$0xff] %vm368, %v367
        %s377 = sand.u32 %s52, 1
        %s378 = scalar_lea.sflag [#allocation4], %s377
        %s379 = sand.u32 %s52, 1
        %s380 = smul.addr %s379, 64
        %s381 = scalar_lea.vmem [#allocation5], %s380
        // Predicated region
        $region29: #{tpu_custom_call.1} parent=23 // pred_check
          %p382 = pneg %p62
        $region30: #{tpu_custom_call.1} parent=23 // pred_check_branch
          %384 = sbr.rel (%p382) target = $region32
        $region31: #{tpu_custom_call.1} parent=23 // pred_region
          %s385 = smul.u32 4, %s18
          %s387 = ssub.s32 1024, 1024
          %388 = vsyncadd %s378, %s387
          %s389 = smul.addr %s385, 2
          %s390 = smul.addr %s389, 128
          %s391 = scalar_lea.hbm %s1, %s390
          %s392 = sshll.u32 %s381, 4
          %s393 = int_to_ptr.vmem [resolvable:$true] %s392
          %398 = dma.vmem_to_hbm [thread:$0]  %s393, 1024, %s391, %s378, 128, 128, 8
        $region32: #{tpu_custom_call.1} parent=23 // pred_fallthru
          _
      $region24: #{tpu_custom_call.1} parent=5 // pred_fallthru
        _
      %p399 = scmp.le.s32.totalorder 2, %s13
      // Predicated region
      $region33: #{tpu_custom_call.1} parent=5 // pred_check
        %p400 = pneg %p399
      $region34: #{tpu_custom_call.1} parent=5 // pred_check_branch
        %402 = sbr.rel (%p400) target = $region36
      $region35: #{tpu_custom_call.1} parent=5 // pred_region
        %s403 = ssub.s32 %s13, 2
        // Predicated region
        $region37: #{tpu_custom_call.1} parent=35 // pred_check
          %p404 = pneg %p68
        $region38: #{tpu_custom_call.1} parent=35 // pred_check_branch
          %406 = sbr.rel (%p404) target = $region40
        $region39: #{tpu_custom_call.1} parent=35 // pred_region
          %s407 = sand.u32 %s53, 1
          %s408 = scalar_lea.sflag [#allocation4], %s407
          %s409 = sand.u32 %s53, 1
          %s410 = smul.addr %s409, 64
          %s411 = scalar_lea.vmem [#allocation5], %s410
          %412 = dma.done %s408, 1024
        $region40: #{tpu_custom_call.1} parent=35 // pred_fallthru
          _
      $region36: #{tpu_custom_call.1} parent=5 // pred_fallthru
        _
    $region6: #{tpu_custom_call.1} parent=1 // loop_footer
      %s17 = sadd.s32 1, %s13
    $region7: #{tpu_custom_call.1} parent=1 // loop_footer_branch
      %12 = sbr.rel target = $region3
    $region8: #{tpu_custom_call.1} parent=1 // loop_exit
      _
    %413 = vsyncpa [#allocation3], 1
    %s414 = scalar_lea.sflag [#allocation3], 1
    %415 = vsyncpa %s414, 1
    %416 = vsyncpa [#allocation4], 1
    %s417 = scalar_lea.sflag [#allocation4], 1
    %418 = vsyncpa %s417, 1

</llo_original>
